<compile_context>
chip_gen: v6e
topology: v6e:2x2x1
jax: 0.10.0
libtpu: 0.0.40
codegen_flags: <defaults>
</compile_context>

<pallas_src>
import jax
import jax.numpy as jnp
from jax import lax
from jax.experimental import pallas as pl
from jax.experimental.pallas import tpu as pltpu


_SQRT_2_OVER_PI = 0.7978845608028654  # sqrt(2/pi)


def _gelu_tanh(x):
    # Matches torch.nn.GELU(approximate='tanh'):
    #   0.5 * x * (1 + tanh(sqrt(2/pi) * (x + 0.044715 * x^3)))
    # Flattened to minimize VPU ops; tanh goes to the EUP slot.
    x2 = x * x
    inner = x * (_SQRT_2_OVER_PI + (_SQRT_2_OVER_PI * 0.044715) * x2)
    return 0.5 * x * (1.0 + jnp.tanh(inner))


def mlp_kernel(x_ref, w1_ref, b1_ref, w2_ref, b2_ref, o_ref):
    # x_ref:  (TM, C)  bf16   activations tile
    # w1_ref: (C, H)   bf16   c_fc weight  (resident across grid steps)
    # b1_ref: (1, H)   f32    c_fc bias
    # w2_ref: (H, C)   bf16   c_proj weight (resident across grid steps)
    # b2_ref: (1, C)   f32    c_proj bias
    # o_ref:  (TM, C)  f32    output tile
    h = jnp.dot(x_ref[...], w1_ref[...],
                preferred_element_type=jnp.float32) + b1_ref[...]
    g = _gelu_tanh(h)                                   # f32 elementwise
    o = jnp.dot(g.astype(w2_ref.dtype), w2_ref[...],
                preferred_element_type=jnp.float32) + b2_ref[...]
    o_ref[...] = o.astype(o_ref.dtype)


def mlp_pallas(x, w1, b1, w2, b2, *, tm=256, compute_dtype=jnp.bfloat16):
    """x: (B, T, C).  w1: (C, 4C), b1: (1, 4C), w2: (4C, C), b2: (1, C)."""
    B, T, C = x.shape
    H = w1.shape[1]                    # 4 * C
    M = B * T

    # MXU-aligned token tile; shrink for tiny inputs (multiple of 8 sublanes).
    if M < tm:
        tm = max(8, ((M + 7) // 8) * 8)
    grid_m = pl.cdiv(M, tm)

    out_dtype = x.dtype
    x2d = x.reshape(M, C).astype(compute_dtype)
    w1c = w1.astype(compute_dtype)
    w2c = w2.astype(compute_dtype)
    b1f = b1.astype(jnp.float32)
    b2f = b2.astype(jnp.float32)

    # VMEM budget for this tile plan (double-buffered x/out tiles, resident
    # weights with 2 pipeline buffers, f32 hidden intermediate), with headroom.
    cb = jnp.dtype(compute_dtype).itemsize
    ob = jnp.dtype(out_dtype).itemsize
    est = (2 * tm * C * cb            # x tiles (double-buffered)
           + 2 * tm * C * ob          # out tiles (double-buffered)
           + 2 * (C * H + H * C) * cb  # weights (pipeline buffers)
           + 2 * (H + C) * 4          # biases
           + tm * H * 4)              # f32 hidden intermediate
    vmem_limit = int(min(64 << 20, max(32 << 20, 2 * est)))

    out2d = pl.pallas_call(
        mlp_kernel,
        out_shape=jax.ShapeDtypeStruct((M, C), out_dtype),
        grid=(grid_m,),
        in_specs=[
            pl.BlockSpec((tm, C), lambda i: (i, 0)),   # x: tiled over tokens
            pl.BlockSpec((C, H), lambda i: (0, 0)),    # W1: resident
            pl.BlockSpec((1, H), lambda i: (0, 0)),    # b1: resident
            pl.BlockSpec((H, C), lambda i: (0, 0)),    # W2: resident
            pl.BlockSpec((1, C), lambda i: (0, 0)),    # b2: resident
        ],
        out_specs=pl.BlockSpec((tm, C), lambda i: (i, 0)),
        compiler_params=pltpu.CompilerParams(
            dimension_semantics=("parallel",),
            vmem_limit_bytes=vmem_limit,
        ),
    )(x2d, w1c, b1f, w2c, b2f)

    return out2d.reshape(B, T, C)


def mlp_reference_matched(x, w1, b1, w2, b2):
    """Reference with the same bf16-input / f32-accum precision as the kernel."""
    B, T, C = x.shape
    f32 = jnp.float32
    xb = x.reshape(B * T, C).astype(jnp.bfloat16).astype(f32)
    w1b = w1.astype(jnp.bfloat16).astype(f32)
    w2b = w2.astype(jnp.bfloat16).astype(f32)
    h = jnp.dot(xb, w1b, precision=lax.Precision.HIGHEST) + b1[0]
    g = _gelu_tanh(h)
    gb = g.astype(jnp.bfloat16).astype(f32)
    o = jnp.dot(gb, w2b, precision=lax.Precision.HIGHEST) + b2[0]
    return o.reshape(B, T, C)


def mlp_reference_f32(x, w1, b1, w2, b2):
    """Full-precision f32 reference of the PyTorch module's forward."""
    h = jnp.einsum("btc,ch->bth", x, w1,
                   precision=lax.Precision.HIGHEST) + b1[0]
    g = _gelu_tanh(h)
    return jnp.einsum("bth,hc->btc", g, w2,
                      precision=lax.Precision.HIGHEST) + b2[0]


if __name__ == "__main__":
    # Small GPT-2-like config: batch=2, seq=8, n_embd=32 -> hidden=128.
    B, T, C = 2, 8, 32
    H = 4 * C

    key = jax.random.PRNGKey(0)
    kx, kw1, kb1, kw2, kb2 = jax.random.split(key, 5)

    x = jax.random.normal(kx, (B, T, C), dtype=jnp.float32)
    # Deterministic "init" of the Linear params (stored as (in, out)).
    w1 = jax.random.normal(kw1, (C, H), dtype=jnp.float32) * 0.02
    b1 = jax.random.normal(kb1, (1, H), dtype=jnp.float32) * 0.02
    w2 = jax.random.normal(kw2, (H, C), dtype=jnp.float32) * 0.02
    b2 = jax.random.normal(kb2, (1, C), dtype=jnp.float32) * 0.02

    out = jax.block_until_ready(mlp_pallas(x, w1, b1, w2, b2))
    assert out.shape == (B, T, C)

    # Exact-precision check against a reference using the same bf16/f32 recipe.
    ref_m = mlp_reference_matched(x, w1, b1, w2, b2)
    assert jnp.allclose(out, ref_m, atol=1e-4, rtol=1e-4), \
        "mismatch vs matched-precision reference"

    # Loose sanity check against the full-f32 module semantics.
    ref_f = mlp_reference_f32(x, w1, b1, w2, b2)
    assert jnp.allclose(out, ref_f, atol=5e-2, rtol=5e-2), \
        "mismatch vs f32 reference"

    print("KERNEL_OK")
</pallas_src>

<mosaic_0001>
module attributes {stable_mosaic.version = 11 : i64} {
  func.func @mlp_kernel(%arg0: i32, %arg1: memref<16x32xbf16, #tpu.memory_space<vmem>>, %arg2: memref<32x128xbf16, #tpu.memory_space<vmem>>, %arg3: memref<1x128xf32, #tpu.memory_space<vmem>>, %arg4: memref<128x32xbf16, #tpu.memory_space<vmem>>, %arg5: memref<1x32xf32, #tpu.memory_space<vmem>>, %arg6: memref<16x32xf32, #tpu.memory_space<vmem>>) attributes {dimension_semantics = [#tpu.dimension_semantics<parallel>], iteration_bounds = array<i64: 1>, scalar_prefetch = 0 : i64, scratch_operands = 0 : i64, tpu.core_type = #tpu.core_type<tc>, window_params = [{transform_indices = @transform_0, window_bounds = array<i64: 16, 32>}, {pipeline_mode = #tpu.pipeline_mode<synchronous>, transform_indices = @transform_1, window_bounds = array<i64: 32, 128>}, {pipeline_mode = #tpu.pipeline_mode<synchronous>, transform_indices = @transform_2, window_bounds = array<i64: 1, 128>}, {pipeline_mode = #tpu.pipeline_mode<synchronous>, transform_indices = @transform_3, window_bounds = array<i64: 128, 32>}, {pipeline_mode = #tpu.pipeline_mode<synchronous>, transform_indices = @transform_4, window_bounds = array<i64: 1, 32>}, {transform_indices = @transform_5, window_bounds = array<i64: 16, 32>}]} {
    %c0 = arith.constant 0 : index
    %c0_0 = arith.constant 0 : index
    %0 = vector.load %arg1[%c0, %c0_0] : memref<16x32xbf16, #tpu.memory_space<vmem>>, vector<16x32xbf16>
    %c0_1 = arith.constant 0 : index
    %c0_2 = arith.constant 0 : index
    %1 = vector.load %arg2[%c0_1, %c0_2] : memref<32x128xbf16, #tpu.memory_space<vmem>>, vector<32x128xbf16>
    %cst = arith.constant dense<0.000000e+00> : vector<16x128xf32>
    %2 = tpu.matmul %0, %1, %cst {dimension_numbers = #tpu.dot_dimension_numbers<[1], [0], [0], [1], [0, 0, 1, 1], [], []>} : vector<16x32xbf16>, vector<32x128xbf16>, vector<16x128xf32> -> vector<16x128xf32>
    %c0_3 = arith.constant 0 : index
    %c0_4 = arith.constant 0 : index
    %3 = vector.load %arg3[%c0_3, %c0_4] : memref<1x128xf32, #tpu.memory_space<vmem>>, vector<1x128xf32>
    %4 = vector.broadcast %3 : vector<1x128xf32> to vector<16x128xf32>
    %5 = arith.addf %2, %4 : vector<16x128xf32>
    %6 = arith.mulf %5, %5 : vector<16x128xf32>
    %cst_5 = arith.constant 0.0356774069 : f32
    %7 = vector.broadcast %cst_5 : f32 to vector<16x128xf32>
    %8 = arith.mulf %7, %6 : vector<16x128xf32>
    %cst_6 = arith.constant 0.797884583 : f32
    %9 = vector.broadcast %cst_6 : f32 to vector<16x128xf32>
    %10 = arith.addf %9, %8 : vector<16x128xf32>
    %11 = arith.mulf %5, %10 : vector<16x128xf32>
    %cst_7 = arith.constant 5.000000e-01 : f32
    %12 = vector.broadcast %cst_7 : f32 to vector<16x128xf32>
    %13 = arith.mulf %12, %5 : vector<16x128xf32>
    %14 = math.tanh %11 : vector<16x128xf32>
    %cst_8 = arith.constant 1.000000e+00 : f32
    %15 = vector.broadcast %cst_8 : f32 to vector<16x128xf32>
    %16 = arith.addf %15, %14 : vector<16x128xf32>
    %17 = arith.mulf %13, %16 : vector<16x128xf32>
    %18 = arith.truncf %17 : vector<16x128xf32> to vector<16x128xbf16>
    %c0_9 = arith.constant 0 : index
    %c0_10 = arith.constant 0 : index
    %19 = vector.load %arg4[%c0_9, %c0_10] : memref<128x32xbf16, #tpu.memory_space<vmem>>, vector<128x32xbf16>
    %cst_11 = arith.constant dense<0.000000e+00> : vector<16x32xf32>
    %20 = tpu.matmul %18, %19, %cst_11 {dimension_numbers = #tpu.dot_dimension_numbers<[1], [0], [0], [1], [0, 0, 1, 1], [], []>} : vector<16x128xbf16>, vector<128x32xbf16>, vector<16x32xf32> -> vector<16x32xf32>
    %c0_12 = arith.constant 0 : index
    %c0_13 = arith.constant 0 : index
    %21 = vector.load %arg5[%c0_12, %c0_13] : memref<1x32xf32, #tpu.memory_space<vmem>>, vector<1x32xf32>
    %22 = vector.broadcast %21 : vector<1x32xf32> to vector<16x32xf32>
    %23 = arith.addf %20, %22 : vector<16x32xf32>
    %c0_14 = arith.constant 0 : index
    %c0_15 = arith.constant 0 : index
    %24 = vector.load %arg6[%c0_14, %c0_15] : memref<16x32xf32, #tpu.memory_space<vmem>>, vector<16x32xf32>
    tpu.vector_store %arg6[%c0_14, %c0_15], %23 {strides = array<i32>} : memref<16x32xf32, #tpu.memory_space<vmem>>, vector<16x32xf32>,
    return
  }
  func.func @transform_0(%arg0: i32) -> (i32, i32) {
    %c0_i32 = arith.constant 0 : i32
    %c0_i32_0 = arith.constant 0 : i32
    return %arg0, %c0_i32 : i32, i32
  }
  func.func @transform_1(%arg0: i32) -> (i32, i32) {
    %c0_i32 = arith.constant 0 : i32
    %c0_i32_0 = arith.constant 0 : i32
    %c0_i32_1 = arith.constant 0 : i32
    return %c0_i32, %c0_i32_0 : i32, i32
  }
  func.func @transform_2(%arg0: i32) -> (i32, i32) {
    %c0_i32 = arith.constant 0 : i32
    %c0_i32_0 = arith.constant 0 : i32
    %c0_i32_1 = arith.constant 0 : i32
    return %c0_i32, %c0_i32_0 : i32, i32
  }
  func.func @transform_3(%arg0: i32) -> (i32, i32) {
    %c0_i32 = arith.constant 0 : i32
    %c0_i32_0 = arith.constant 0 : i32
    %c0_i32_1 = arith.constant 0 : i32
    return %c0_i32, %c0_i32_0 : i32, i32
  }
  func.func @transform_4(%arg0: i32) -> (i32, i32) {
    %c0_i32 = arith.constant 0 : i32
    %c0_i32_0 = arith.constant 0 : i32
    %c0_i32_1 = arith.constant 0 : i32
    return %c0_i32, %c0_i32_0 : i32, i32
  }
  func.func @transform_5(%arg0: i32) -> (i32, i32) {
    %c0_i32 = arith.constant 0 : i32
    %c0_i32_0 = arith.constant 0 : i32
    return %arg0, %c0_i32 : i32, i32
  }
}

</mosaic_0001>

<llo_original>
// kernel: tpu_custom_call.1
$region0: #{tpu_custom_call.1}
  #allocation0 [shape = 'u32[]', space=smem, size = 0x4, offset = 0x4, fixed_abs, tag = 'smem constant byte address 0x4 - core index']
  #allocation1 [shape = 'u32[144,128]{1,0:T(1,128)}', space=vmem, size = 0x12000, scoped, tag = 'internal scratch']
  %s0 = inlined_call_operand.vmem [shape: bf16[16,32], index: 0, kind: input, shape index: {}]
  %s1 = inlined_call_operand.vmem [shape: bf16[32,128], index: 1, kind: input, shape index: {}]
  %s2 = inlined_call_operand.vmem [shape: f32[1,128], index: 2, kind: input, shape index: {}]
  %s3 = inlined_call_operand.vmem [shape: bf16[128,32], index: 3, kind: input, shape index: {}]
  %s4 = inlined_call_operand.vmem [shape: f32[1,32], index: 4, kind: input, shape index: {}]
  %s5 = inlined_call_operand.hbm [shape: f32[16,32], index: 5, kind: output, shape index: {}]
  %s6 = sld [smem:[#allocation0]]
  $region30: #{tpu_custom_call.1} parent=0
    _
  %s8 = ssub.s32 1, %s6
  %s9 = scalar_select 0, %s8, %s6
  $region1: #{tpu_custom_call.1} parent=0
    #allocation2 [shape = 'u8[8192]{0}', space=vmem, size = 0x2000, scoped, tag = 'output window, operand 0, single buffered']
    #allocation3 [shape = 's32[1]{0}', space=sflag, size = 0x4, scoped, tag = 'scoped memory for tpu_custom_call.1']
    %10 = vsyncpa [#allocation3], 0
    // Predicated region
    $region2: #{tpu_custom_call.1} parent=1 // pred_check
      _
    $region3: #{tpu_custom_call.1} parent=1 // pred_check_branch
      %12 = sbr.rel (0) target = $region5
    $region4: #{tpu_custom_call.1} parent=1 // pred_region
      _
    $region5: #{tpu_custom_call.1} parent=1 // pred_fallthru
      _
    // Predicated region
    $region6: #{tpu_custom_call.1} parent=1 // pred_check
      _
    $region7: #{tpu_custom_call.1} parent=1 // pred_check_branch
      %14 = sbr.rel (0) target = $region9
    $region8: #{tpu_custom_call.1} parent=1 // pred_region
      _
    $region9: #{tpu_custom_call.1} parent=1 // pred_fallthru
      _
    // Predicated region
    $region10: #{tpu_custom_call.1} parent=1 // pred_check
      _
    $region11: #{tpu_custom_call.1} parent=1 // pred_check_branch
      %16 = sbr.rel (0) target = $region13
    $region12: #{tpu_custom_call.1} parent=1 // pred_region
      _
    $region13: #{tpu_custom_call.1} parent=1 // pred_fallthru
      _
    // Predicated region
    $region14: #{tpu_custom_call.1} parent=1 // pred_check
      _
    $region15: #{tpu_custom_call.1} parent=1 // pred_check_branch
      %18 = sbr.rel (0) target = $region17
    $region16: #{tpu_custom_call.1} parent=1 // pred_region
      _
    $region17: #{tpu_custom_call.1} parent=1 // pred_fallthru
      _
    // Predicated region
    $region18: #{tpu_custom_call.1} parent=1 // pred_check
      _
    $region19: #{tpu_custom_call.1} parent=1 // pred_check_branch
      %20 = sbr.rel (0) target = $region21
    $region20: #{tpu_custom_call.1} parent=1 // pred_region
      _
    $region21: #{tpu_custom_call.1} parent=1 // pred_fallthru
      _
    %v22 = vld [vmem:[%s0] sm:$0xf]
    %v23 = vld [vmem:[%s0 + $0x4] sm:$0xf]
    %v24 = vld [vmem:[%s1] sm:$0xf]
    %v25 = vld [vmem:[%s1 + $0x4] sm:$0xf]
    %v26 = vld [vmem:[%s1 + $0x8] sm:$0xf]
    %v27 = vld [vmem:[%s1 + $0xc] sm:$0xf]
    %v28 = vld [vmem:[%s2] sm:$0x1]
    %v30 = vlaneseq
    %v31 = vshrl.u32 %v30, 7
    %v32 = vsub.s32 0, %v31
    %v33 = vrot.slane %v28, %v32
    %v37 = vunpack.c.l.b16 %v22
    %v38 = vunpack.c.l.b16 %v23
    %v39 = vpack.c.b16 %v38, %v37
    %v44 = vunpack.c.l.b16 %v24
    %v45 = vunpack.c.l.b16 %v25
    %v46 = vunpack.c.l.b16 %v26
    %v47 = vunpack.c.l.b16 %v27
    %v48 = vpack.c.b16 %v45, %v44
    %v49 = vpack.c.b16 %v47, %v46
    %vm52 = vcmask 261120
    %v54 = vsel %vm52, %v39, 0
    %56 = vmatprep.subr.bf16.mxu0 0
    %57 = vmatpush1.bf16.msra.mxu0 0
    %58 = vmatprep.subr.bf16.mxu0 0
    %59 = vmatpush1.bf16.msra.mxu0 0
    %60 = vmatprep.subr.bf16.mxu0 0
    %61 = vmatpush1.bf16.msra.mxu0 0
    %62 = vmatprep.subr.bf16.mxu0 0
    %63 = vmatpush1.bf16.msra.mxu0 0
    %64 = vmatprep.subr.bf16.mxu0 0
    %65 = vmatpush1.bf16.msra.mxu0 0
    %66 = vmatprep.subr.bf16.mxu0 0
    %67 = vmatpush1.bf16.msra.mxu0 0
    %68 = vmatprep.subr.bf16.mxu0 0
    %69 = vmatpush1.bf16.msra.mxu0 %v49
    %70 = vmatprep.subr.bf16.mxu0 0
    %71 = vmatpush1.bf16.msra.mxu0 %v48
    %72 = vmatprep.subr.bf16.mxu0 0
    %73 = vmatpush2.bf16.msra.mxu0 0
    %74 = vmatprep.subr.bf16.mxu0 0
    %75 = vmatpush2.bf16.msra.mxu0 0
    %76 = vmatprep.subr.bf16.mxu0 0
    %77 = vmatpush2.bf16.msra.mxu0 0
    %78 = vmatprep.subr.bf16.mxu0 0
    %79 = vmatpush2.bf16.msra.mxu0 0
    %80 = vmatprep.subr.bf16.mxu0 0
    %81 = vmatpush2.bf16.msra.mxu0 0
    %82 = vmatprep.subr.bf16.mxu0 0
    %83 = vmatpush2.bf16.msra.mxu0 0
    %84 = vmatprep.subr.bf16.mxu0 0
    %85 = vmatpush2.bf16.msra.mxu0 0
    %86 = vmatprep.subr.bf16.mxu0 0
    %87 = vmatpush2.bf16.msra.mxu0 0
    %88 = vmatprep.mubr.bf16.mxu0 0
    %89 = vmatmul.mubr.bf16.gmra.mxu0 %v54
    %v90 = vpop.f32.mrf.mxu0
    %v91 = vadd.f32 %v33, %v90
    %v92 = vpop.f32.mrf.mxu0
    %v93 = vpop.f32.mrf.mxu0
    %v94 = vadd.f32 %v33, %v93
    %v95 = vpop.f32.mrf.mxu0
    %96 = vdwg.mxu0
    %v97 = vmul.f32 %v91, %v91
    %v98 = vmul.f32 %v94, %v94
    %v99 = vmul.f32 %v97, 0.035677407
    %v100 = vmul.f32 %v98, 0.035677407
    %v101 = vadd.f32 %v99, 0.7978846
    %v102 = vadd.f32 %v100, 0.7978846
    %v103 = vmul.f32 %v91, %v101
    %v104 = vmul.f32 %v94, %v102
    %v105 = vmul.f32 %v91, 0.5
    %v106 = vmul.f32 %v94, 0.5
    %v107 = vtanh.pop %v103
    %v108 = vtanh.pop %v104
    %v109 = vadd.f32 %v107, 1.0
    %v110 = vadd.f32 %v108, 1.0
    %v111 = vmul.f32 %v105, %v109
    %v112 = vmul.f32 %v106, %v110
    %v113 = vpack.c.bf16 %v112, %v111
    %v114 = vld [vmem:[%s3] sm:$0xf]
    %v115 = vld [vmem:[%s3 + $0x4] sm:$0xf]
    %v116 = vld [vmem:[%s3 + $0x8] sm:$0xf]
    %v117 = vld [vmem:[%s3 + $0xc] sm:$0xf]
    %v118 = vld [vmem:[%s3 + $0x10] sm:$0xf]
    %v119 = vld [vmem:[%s3 + $0x14] sm:$0xf]
    %v120 = vld [vmem:[%s3 + $0x18] sm:$0xf]
    %v121 = vld [vmem:[%s3 + $0x1c] sm:$0xf]
    %v122 = vld [vmem:[%s3 + $0x20] sm:$0xf]
    %v123 = vld [vmem:[%s3 + $0x24] sm:$0xf]
    %v124 = vld [vmem:[%s3 + $0x28] sm:$0xf]
    %v125 = vld [vmem:[%s3 + $0x2c] sm:$0xf]
    %v126 = vld [vmem:[%s3 + $0x30] sm:$0xf]
    %v127 = vld [vmem:[%s3 + $0x34] sm:$0xf]
    %v128 = vld [vmem:[%s3 + $0x38] sm:$0xf]
    %v129 = vld [vmem:[%s3 + $0x3c] sm:$0xf]
    %v130 = vld [vmem:[%s4] sm:$0x1]
    %v132 = vlaneseq
    %v133 = vshrl.u32 %v132, 7
    %v134 = vsub.s32 0, %v133
    %v135 = vrot.slane %v130, %v134
    %v153 = vunpack.c.l.b16 %v114
    %v154 = vunpack.c.l.b16 %v115
    %v155 = vunpack.c.l.b16 %v116
    %v156 = vunpack.c.l.b16 %v117
    %v157 = vunpack.c.l.b16 %v118
    %v158 = vunpack.c.l.b16 %v119
    %v159 = vunpack.c.l.b16 %v120
    %v160 = vunpack.c.l.b16 %v121
    %v161 = vunpack.c.l.b16 %v122
    %v162 = vunpack.c.l.b16 %v123
    %v163 = vunpack.c.l.b16 %v124
    %v164 = vunpack.c.l.b16 %v125
    %v165 = vunpack.c.l.b16 %v126
    %v166 = vunpack.c.l.b16 %v127
    %v167 = vunpack.c.l.b16 %v128
    %v168 = vunpack.c.l.b16 %v129
    %v169 = vpack.c.b16 %v154, %v153
    %v170 = vpack.c.b16 %v156, %v155
    %v171 = vpack.c.b16 %v158, %v157
    %v172 = vpack.c.b16 %v160, %v159
    %v173 = vpack.c.b16 %v162, %v161
    %v174 = vpack.c.b16 %v164, %v163
    %v175 = vpack.c.b16 %v166, %v165
    %v176 = vpack.c.b16 %v168, %v167
    %185 = vmatprep.subr.bf16.mxu0 0
    %186 = vmatpush1.bf16.msra.mxu0 %v176
    %187 = vmatprep.subr.bf16.mxu0 0
    %188 = vmatpush1.bf16.msra.mxu0 %v175
    %189 = vmatprep.subr.bf16.mxu0 0
    %190 = vmatpush1.bf16.msra.mxu0 %v174
    %191 = vmatprep.subr.bf16.mxu0 0
    %192 = vmatpush1.bf16.msra.mxu0 %v173
    %193 = vmatprep.subr.bf16.mxu0 0
    %194 = vmatpush1.bf16.msra.mxu0 %v172
    %195 = vmatprep.subr.bf16.mxu0 0
    %196 = vmatpush1.bf16.msra.mxu0 %v171
    %197 = vmatprep.subr.bf16.mxu0 0
    %198 = vmatpush1.bf16.msra.mxu0 %v170
    %199 = vmatprep.subr.bf16.mxu0 0
    %200 = vmatpush1.bf16.msra.mxu0 %v169
    %201 = vmatprep.subr.bf16.mxu0 0
    %202 = vmatpush2.bf16.msra.mxu0 0
    %203 = vmatprep.subr.bf16.mxu0 0
    %204 = vmatpush2.bf16.msra.mxu0 0
    %205 = vmatprep.subr.bf16.mxu0 0
    %206 = vmatpush2.bf16.msra.mxu0 0
    %207 = vmatprep.subr.bf16.mxu0 0
    %208 = vmatpush2.bf16.msra.mxu0 0
    %209 = vmatprep.subr.bf16.mxu0 0
    %210 = vmatpush2.bf16.msra.mxu0 0
    %211 = vmatprep.subr.bf16.mxu0 0
    %212 = vmatpush2.bf16.msra.mxu0 0
    %213 = vmatprep.subr.bf16.mxu0 0
    %214 = vmatpush2.bf16.msra.mxu0 0
    %215 = vmatprep.subr.bf16.mxu0 0
    %216 = vmatpush2.bf16.msra.mxu0 0
    %217 = vmatprep.mubr.bf16.mxu0 0
    %218 = vmatmul.mubr.bf16.gmra.mxu0 %v113
    %v219 = vpop.f32.mrf.mxu0
    %v220 = vadd.f32 %v135, %v219
    %v221 = vpop.f32.mrf.mxu0
    %v222 = vpop.f32.mrf.mxu0
    %v223 = vadd.f32 %v135, %v222
    %v224 = vpop.f32.mrf.mxu0
    %225 = vdwg.mxu0
    %226 = vst.msk [vmem:[#allocation2] sm:$0xff] %vm52, %v220
    %227 = vst.msk [vmem:[#allocation2 + $0x8] sm:$0xff] %vm52, %v223
    // Predicated region
    $region22: #{tpu_custom_call.1} parent=1 // pred_check
      _
    $region23: #{tpu_custom_call.1} parent=1 // pred_check_branch
      %229 = sbr.rel (0) target = $region25
    $region24: #{tpu_custom_call.1} parent=1 // pred_region
      %s231 = ssub.s32 256, 256
      %232 = vsyncadd [#allocation3], %s231
      %s233 = sshll.u32 [#allocation2], 4
      %s234 = int_to_ptr.vmem [resolvable:$true] %s233
      %239 = dma.vmem_to_hbm [thread:$0]  %s234, 256, %s5, [#allocation3], 128, 128, 8
    $region25: #{tpu_custom_call.1} parent=1 // pred_fallthru
      _
    // Predicated region
    $region26: #{tpu_custom_call.1} parent=1 // pred_check
      _
    $region27: #{tpu_custom_call.1} parent=1 // pred_check_branch
      %241 = sbr.rel (0) target = $region29
    $region28: #{tpu_custom_call.1} parent=1 // pred_region
      %242 = dma.done [#allocation3], 256
    $region29: #{tpu_custom_call.1} parent=1 // pred_fallthru
      _
    %243 = vsyncpa [#allocation3], 1

</llo_original>
